<compile_context>
chip_gen: v5e
topology: v5e:2x2
jax: 0.10.0
libtpu: 0.0.40
codegen_flags: <defaults>
</compile_context>

<pallas_src>
import jax
import jax.numpy as jnp
from jax.experimental import pallas as pl
from jax.experimental.pallas import tpu as pltpu


# ----------------------------------------------------------------------------
# helpers
# ----------------------------------------------------------------------------
_DEF_TM = 512
_DEF_TN = 512


def _round_up(x, m):
    return ((x + m - 1) // m) * m


def _sublane_gran(dtype):
    # Rows per fully-packed sublane group: 8 for f32, 16 for bf16, 32 for int8.
    return max(8, 32 // jnp.dtype(dtype).itemsize)


def _default_tk(compute_dtype):
    # Grow K first: acc RMW cost per K step is ~tm*tn and independent of tk.
    return 1024 if jnp.dtype(compute_dtype).itemsize <= 2 else 512


def _plan_nk(C, D, compute_dtype, tn_req, tk_req):
    if tn_req is None:
        tn_req = _DEF_TN
    if tk_req is None:
        tk_req = _default_tk(compute_dtype)
    tn = min(tn_req, _round_up(C, 128))
    tk = min(tk_req, _round_up(D, 128))
    return tn, tk, _round_up(C, tn), _round_up(D, tk)


# ----------------------------------------------------------------------------
# kernels
# ----------------------------------------------------------------------------
def _linear_kernel_inplace(x_ref, w_ref, b_ref, o_ref):
    """f32 output: accumulate directly into the resident output block.

    x_ref: (tm, tk)   activations (compute dtype)
    w_ref: (tk, tn)   pre-transposed weight (compute dtype)
    b_ref: (1,  tn)   bias (f32)
    o_ref: (tm, tn)   f32 output tile (resident across the K axis)
    """
    k = pl.program_id(2)

    @pl.when(k == 0)
    def _init():
        o_ref[...] = jnp.broadcast_to(b_ref[...], o_ref.shape).astype(o_ref.dtype)

    o_ref[...] += jnp.dot(x_ref[...], w_ref[...],
                          preferred_element_type=jnp.float32)


def _linear_kernel_acc(x_ref, w_ref, b_ref, o_ref, acc_ref):
    """Narrow output dtype: keep an f32 accumulator scratch, cast at the end."""
    k = pl.program_id(2)

    @pl.when(k == 0)
    def _init():
        acc_ref[...] = jnp.broadcast_to(b_ref[...], acc_ref.shape)

    acc_ref[...] += jnp.dot(x_ref[...], w_ref[...],
                            preferred_element_type=jnp.float32)

    @pl.when(k == pl.num_programs(2) - 1)
    def _finalize():
        o_ref[...] = acc_ref[...].astype(o_ref.dtype)


# ----------------------------------------------------------------------------
# one-time parameter preparation (load time, NOT per call)
# ----------------------------------------------------------------------------
def prepare_lr_params(weight, bias, *, compute_dtype=None, tn=None, tk=None):
    """Transpose weight to (D, C), cast to the compute dtype, zero-pad.

    weight: (C, D) PyTorch nn.Linear layout (out_features, in_features)
    bias:   (C,)
    compute_dtype: e.g. jnp.bfloat16 to keep the weight bf16-at-rest for the
        MXU (halved HBM traffic); accumulation in the kernel stays f32.
    """
    C, D = weight.shape
    cdt = jnp.dtype(weight.dtype if compute_dtype is None else compute_dtype)
    tn, tk, C_pad, D_pad = _plan_nk(C, D, cdt, tn, tk)

    w_t = jnp.asarray(weight, cdt).T                      # (D, C)
    if (D_pad, C_pad) != (D, C):
        w_t = jnp.pad(w_t, ((0, D_pad - D), (0, C_pad - C)))

    b = jnp.asarray(bias, jnp.float32).reshape(1, C)
    if C_pad != C:
        b = jnp.pad(b, ((0, 0), (0, C_pad - C)))

    return {"w_t": w_t, "bias": b, "C": C, "D": D, "tn": tn, "tk": tk}


# ----------------------------------------------------------------------------
# forward
# ----------------------------------------------------------------------------
def lr_forward(x, params, *, tm=_DEF_TM, out_dtype=None, vmem_limit_bytes=None):
    """Pallas equivalent of LR.forward: x @ W^T + b.

    x:      (B, D) activations
    params: dict from prepare_lr_params (weight already transposed/cast/padded)
    """
    w_t, bias2d = params["w_t"], params["bias"]
    C, D = params["C"], params["D"]
    tn, tk = params["tn"], params["tk"]
    D_pad, C_pad = w_t.shape

    B, Dx = x.shape
    assert Dx == D, "x feature dim must match the weight's in_features"

    out_dtype = jnp.dtype(x.dtype if out_dtype is None else out_dtype)
    compute_dtype = w_t.dtype
    if x.dtype != compute_dtype:
        x = x.astype(compute_dtype)

    # M tile: clamp to the problem, aligned to the packed-sublane granularity.
    gran = _sublane_gran(compute_dtype)
    tm = min(tm, _round_up(B, gran))
    B_pad = _round_up(B, tm)

    # v7x megacore: make sure a 'parallel' axis has >= 2 blocks when possible.
    if B_pad // tm == 1 and C_pad // tn == 1 and tn % 256 == 0:
        tn //= 2

    # Pad activations so every tile is full (zero K padding is reduction-safe,
    # padded M rows are sliced off below). Weight/bias were padded at prepare
    # time, so this is the only per-call pad and it touches only x.
    # TODO(synk): replace with masked edge tiles (cdiv grid) to drop this pad.
    if (B_pad, D_pad) != (B, D):
        x = jnp.pad(x, ((0, B_pad - B), (0, D_pad - D)))

    grid = (B_pad // tm, C_pad // tn, D_pad // tk)

    use_acc = out_dtype != jnp.dtype(jnp.float32)
    kernel = _linear_kernel_acc if use_acc else _linear_kernel_inplace
    scratch = [pltpu.VMEM((tm, tn), jnp.float32)] if use_acc else []

    in_isz = jnp.dtype(compute_dtype).itemsize
    out_isz = out_dtype.itemsize

    # Double-buffered tile footprint; keep well under v7x's 64 MiB VMEM.
    footprint = (2 * tm * tk * in_isz + 2 * tk * tn * in_isz
                 + 2 * tm * tn * out_isz + 2 * tn * 4
                 + (tm * tn * 4 if use_acc else 0))
    if vmem_limit_bytes is None:
        vmem_limit_bytes = min(max(2 * footprint + (8 << 20), 16 << 20), 48 << 20)

    cost = pl.CostEstimate(
        flops=2 * B * D * C,
        transcendentals=0,
        bytes_accessed=in_isz * (B * D + C * D) + 4 * C + out_isz * B * C,
    )

    out_padded = pl.pallas_call(
        kernel,
        out_shape=jax.ShapeDtypeStruct((B_pad, C_pad), out_dtype),
        grid=grid,
        in_specs=[
            pl.BlockSpec((tm, tk), lambda i, j, k: (i, k)),   # activations
            pl.BlockSpec((tk, tn), lambda i, j, k: (k, j)),   # weight (D, C), pre-transposed
            pl.BlockSpec((1, tn), lambda i, j, k: (0, j)),    # bias
        ],
        out_specs=pl.BlockSpec((tm, tn), lambda i, j, k: (i, j)),
        scratch_shapes=scratch,
        compiler_params=pltpu.CompilerParams(
            dimension_semantics=("parallel", "parallel", "arbitrary"),
            vmem_limit_bytes=vmem_limit_bytes,
        ),
        cost_estimate=cost,
    )(x, w_t, bias2d)

    if (B_pad, C_pad) == (B, C):
        return out_padded
    return out_padded[:B, :C]


# ----------------------------------------------------------------------------
# self-test
# ----------------------------------------------------------------------------
if __name__ == "__main__":
    # Small shapes consistent with the module: LR(input_size=32, num_classes=16)
    batch, input_size, num_classes = 8, 32, 16

    key = jax.random.PRNGKey(0)
    kx, kw, kb = jax.random.split(key, 3)

    # Deterministic params mimicking torch.nn.Linear's default
    # uniform(-1/sqrt(in), 1/sqrt(in)) initialization.
    bound = 1.0 / (input_size ** 0.5)
    weight = jax.random.uniform(
        kw, (num_classes, input_size), jnp.float32, minval=-bound, maxval=bound)
    bias = jax.random.uniform(
        kb, (num_classes,), jnp.float32, minval=-bound, maxval=bound)
    x = jax.random.normal(kx, (batch, input_size), jnp.float32)

    # Reference (same math as torch's x @ W^T + b).
    ref = x @ weight.T + bias

    # f32 path — tight check. Weight prepared once (transpose/pad at load time).
    params_f32 = prepare_lr_params(weight, bias)
    out = jax.block_until_ready(lr_forward(x, params_f32))
    assert out.shape == (batch, num_classes)
    assert jnp.allclose(out, ref, atol=1e-5, rtol=1e-5)

    # bf16-weights-at-rest / f32-accumulate path (recommended for v5e/v6e/v7x).
    params_bf16 = prepare_lr_params(weight, bias, compute_dtype=jnp.bfloat16)
    out_bf16 = jax.block_until_ready(lr_forward(x, params_bf16))
    assert out_bf16.shape == (batch, num_classes)
    assert jnp.allclose(out_bf16, ref, atol=5e-2, rtol=5e-2)

    print("KERNEL_OK")
</pallas_src>

<mosaic_0001>
module attributes {stable_mosaic.version = 11 : i64} {
  func.func @_linear_kernel_inplace(%arg0: i32, %arg1: i32, %arg2: i32, %arg3: memref<8x128xf32, #tpu.memory_space<vmem>>, %arg4: memref<128x128xf32, #tpu.memory_space<vmem>>, %arg5: memref<1x128xf32, #tpu.memory_space<vmem>>, %arg6: memref<8x128xf32, #tpu.memory_space<vmem>>) attributes {dimension_semantics = [#tpu.dimension_semantics<parallel>, #tpu.dimension_semantics<parallel>, #tpu.dimension_semantics<arbitrary>], iteration_bounds = array<i64: 1, 1, 1>, scalar_prefetch = 0 : i64, scratch_operands = 0 : i64, tpu.core_type = #tpu.core_type<tc>, window_params = [{transform_indices = @transform_0, window_bounds = array<i64: 8, 128>}, {transform_indices = @transform_1, window_bounds = array<i64: 128, 128>}, {transform_indices = @transform_2, window_bounds = array<i64: 1, 128>}, {transform_indices = @transform_3, window_bounds = array<i64: 8, 128>}]} {
    %c0_i32 = arith.constant 0 : i32
    %0 = arith.cmpi eq, %arg2, %c0_i32 : i32
    %1 = arith.extui %0 : i1 to i32
    %c0_i32_0 = arith.constant 0 : i32
    %2 = arith.cmpi ne, %1, %c0_i32_0 : i32
    scf.if %2 {
      %c0_8 = arith.constant 0 : index
      %c0_9 = arith.constant 0 : index
      %9 = vector.load %arg5[%c0_8, %c0_9] : memref<1x128xf32, #tpu.memory_space<vmem>>, vector<1x128xf32>
      %10 = vector.shape_cast %9 : vector<1x128xf32> to vector<1x128xf32>
      %11 = vector.broadcast %10 : vector<1x128xf32> to vector<8x128xf32>
      %c0_10 = arith.constant 0 : index
      %c0_11 = arith.constant 0 : index
      %12 = vector.load %arg6[%c0_10, %c0_11] : memref<8x128xf32, #tpu.memory_space<vmem>>, vector<8x128xf32>
      tpu.vector_store %arg6[%c0_10, %c0_11], %11 {strides = array<i32>} : memref<8x128xf32, #tpu.memory_space<vmem>>, vector<8x128xf32>,
    } else {
    }
    %c0 = arith.constant 0 : index
    %c0_1 = arith.constant 0 : index
    %3 = vector.load %arg6[%c0, %c0_1] : memref<8x128xf32, #tpu.memory_space<vmem>>, vector<8x128xf32>
    %c0_2 = arith.constant 0 : index
    %c0_3 = arith.constant 0 : index
    %4 = vector.load %arg3[%c0_2, %c0_3] : memref<8x128xf32, #tpu.memory_space<vmem>>, vector<8x128xf32>
    %c0_4 = arith.constant 0 : index
    %c0_5 = arith.constant 0 : index
    %5 = vector.load %arg4[%c0_4, %c0_5] : memref<128x128xf32, #tpu.memory_space<vmem>>, vector<128x128xf32>
    %cst = arith.constant dense<0.000000e+00> : vector<8x128xf32>
    %6 = tpu.matmul %4, %5, %cst {dimension_numbers = #tpu.dot_dimension_numbers<[1], [0], [0], [1], [0, 0, 1, 1], [], []>} : vector<8x128xf32>, vector<128x128xf32>, vector<8x128xf32> -> vector<8x128xf32>
    %7 = arith.addf %3, %6 : vector<8x128xf32>
    %c0_6 = arith.constant 0 : index
    %c0_7 = arith.constant 0 : index
    %8 = vector.load %arg6[%c0_6, %c0_7] : memref<8x128xf32, #tpu.memory_space<vmem>>, vector<8x128xf32>
    tpu.vector_store %arg6[%c0_6, %c0_7], %7 {strides = array<i32>} : memref<8x128xf32, #tpu.memory_space<vmem>>, vector<8x128xf32>,
    return
  }
  func.func @transform_0(%arg0: i32, %arg1: i32, %arg2: i32) -> (i32, i32) {
    %c0_i32 = arith.constant 0 : i32
    return %arg0, %arg2 : i32, i32
  }
  func.func @transform_1(%arg0: i32, %arg1: i32, %arg2: i32) -> (i32, i32) {
    %c0_i32 = arith.constant 0 : i32
    return %arg2, %arg1 : i32, i32
  }
  func.func @transform_2(%arg0: i32, %arg1: i32, %arg2: i32) -> (i32, i32) {
    %c0_i32 = arith.constant 0 : i32
    %c0_i32_0 = arith.constant 0 : i32
    return %c0_i32, %arg1 : i32, i32
  }
  func.func @transform_3(%arg0: i32, %arg1: i32, %arg2: i32) -> (i32, i32) {
    %c0_i32 = arith.constant 0 : i32
    return %arg0, %arg1 : i32, i32
  }
}

</mosaic_0001>

<llo_original>
// kernel: tpu_custom_call.1
$region0: #{tpu_custom_call.1}
  #allocation0 [shape = 'u32[]', space=smem, size = 0x4, offset = 0x4, fixed_abs, tag = 'smem constant byte address 0x4 - core index']
  #allocation1 [shape = 'u32[72,128]{1,0:T(1,128)}', space=vmem, size = 0x9000, scoped, tag = 'internal scratch']
  %s0 = inlined_call_operand.hbm [shape: f32[8,128], index: 0, kind: input, shape index: {}]
  %s1 = inlined_call_operand.hbm [shape: f32[128,128], index: 1, kind: input, shape index: {}]
  %s2 = inlined_call_operand.vmem [shape: f32[1,128], index: 2, kind: input, shape index: {}]
  %s3 = inlined_call_operand.hbm [shape: f32[8,128], index: 3, kind: output, shape index: {}]
  %s4 = sld [smem:[#allocation0]]
  $region34: #{tpu_custom_call.1} parent=0
    _
  %s6 = ssub.s32 1, %s4
  %s7 = scalar_select 0, %s6, %s4
  $region1: #{tpu_custom_call.1} parent=0
    #allocation2 [shape = 'u8[4096]{0}', space=vmem, size = 0x1000, scoped, tag = 'input window, operand 0, single buffered']
    #allocation3 [shape = 's32[1]{0}', space=sflag, size = 0x4, scoped, tag = 'scoped memory for tpu_custom_call.1']
    #allocation4 [shape = 's32[1]{0}', space=sflag, size = 0x4, scoped, tag = 'scoped memory for tpu_custom_call.1']
    #allocation5 [shape = 'u8[65536]{0}', space=vmem, size = 0x10000, scoped, tag = 'input window, operand 1, single buffered']
    #allocation6 [shape = 's32[1]{0}', space=sflag, size = 0x4, scoped, tag = 'scoped memory for tpu_custom_call.1']
    #allocation7 [shape = 'u8[4096]{0}', space=vmem, size = 0x1000, scoped, tag = 'output window, operand 0, single buffered']
    %8 = vsyncpa [#allocation3], 0
    %9 = vsyncpa [#allocation6], 0
    %10 = vsyncpa [#allocation4], 0
    // Predicated region
    $region2: #{tpu_custom_call.1} parent=1 // pred_check
      _
    $region3: #{tpu_custom_call.1} parent=1 // pred_check_branch
      %12 = sbr.rel (0) target = $region5
    $region4: #{tpu_custom_call.1} parent=1 // pred_region
      %14 = vsyncadd [#allocation3], 0
      %s16 = sshll.u32 %s0, 4
      %s17 = int_to_ptr.hbm [resolvable:$true] %s16
      %s18 = sshll.u32 [#allocation2], 4
      %s19 = int_to_ptr.vmem [resolvable:$true] %s18
      %21 = dma.hbm_to_vmem [thread:$0]  %s17, 128, %s19, [#allocation3]
    $region5: #{tpu_custom_call.1} parent=1 // pred_fallthru
      _
    // Predicated region
    $region6: #{tpu_custom_call.1} parent=1 // pred_check
      _
    $region7: #{tpu_custom_call.1} parent=1 // pred_check_branch
      %23 = sbr.rel (0) target = $region9
    $region8: #{tpu_custom_call.1} parent=1 // pred_region
      %25 = vsyncadd [#allocation6], 0
      %s26 = sshll.u32 %s1, 4
      %s27 = int_to_ptr.hbm [resolvable:$true] %s26
      %s28 = sshll.u32 [#allocation5], 4
      %s29 = int_to_ptr.vmem [resolvable:$true] %s28
      %34 = dma.hbm_to_vmem [thread:$0]  %s27, 2048, %s29, [#allocation6], 128, 128, 8
    $region9: #{tpu_custom_call.1} parent=1 // pred_fallthru
      _
    // Predicated region
    $region10: #{tpu_custom_call.1} parent=1 // pred_check
      _
    $region11: #{tpu_custom_call.1} parent=1 // pred_check_branch
      %36 = sbr.rel (0) target = $region13
    $region12: #{tpu_custom_call.1} parent=1 // pred_region
      _
    $region13: #{tpu_custom_call.1} parent=1 // pred_fallthru
      _
    // Predicated region
    $region14: #{tpu_custom_call.1} parent=1 // pred_check
      _
    $region15: #{tpu_custom_call.1} parent=1 // pred_check_branch
      %38 = sbr.rel (0) target = $region17
    $region16: #{tpu_custom_call.1} parent=1 // pred_region
      %40 = dma.done [#allocation3], 128
    $region17: #{tpu_custom_call.1} parent=1 // pred_fallthru
      _
    // Predicated region
    $region18: #{tpu_custom_call.1} parent=1 // pred_check
      _
    $region19: #{tpu_custom_call.1} parent=1 // pred_check_branch
      %42 = sbr.rel (0) target = $region21
    $region20: #{tpu_custom_call.1} parent=1 // pred_region
      %44 = dma.done [#allocation6], 2048
    $region21: #{tpu_custom_call.1} parent=1 // pred_fallthru
      _
    %p45 = scmp.eq.s32.totalorder 0, 0
    // Predicated region
    $region22: #{tpu_custom_call.1} parent=1 // pred_check
      %p46 = pneg %p45
    $region23: #{tpu_custom_call.1} parent=1 // pred_check_branch
      %48 = sbr.rel (%p46) target = $region25
    $region24: #{tpu_custom_call.1} parent=1 // pred_region
      %v49 = vld [vmem:[%s2] sm:$0x1]
      %v51 = vperm.slane %v49, 0
      %53 = vst [vmem:[#allocation7] sm:$0xff] %v51
    $region25: #{tpu_custom_call.1} parent=1 // pred_fallthru
      _
    %v54 = vld [vmem:[#allocation7] sm:$0xff]
    %v55 = vld [vmem:[#allocation2] sm:$0xff]
    %v56 = vld [vmem:[#allocation5] sm:$0xff]
    %v57 = vld [vmem:[#allocation5 + $0x8] sm:$0xff]
    %v58 = vld [vmem:[#allocation5 + $0x10] sm:$0xff]
    %v59 = vld [vmem:[#allocation5 + $0x18] sm:$0xff]
    %v60 = vld [vmem:[#allocation5 + $0x20] sm:$0xff]
    %v61 = vld [vmem:[#allocation5 + $0x28] sm:$0xff]
    %v62 = vld [vmem:[#allocation5 + $0x30] sm:$0xff]
    %v63 = vld [vmem:[#allocation5 + $0x38] sm:$0xff]
    %v64 = vld [vmem:[#allocation5 + $0x40] sm:$0xff]
    %v65 = vld [vmem:[#allocation5 + $0x48] sm:$0xff]
    %v66 = vld [vmem:[#allocation5 + $0x50] sm:$0xff]
    %v67 = vld [vmem:[#allocation5 + $0x58] sm:$0xff]
    %v68 = vld [vmem:[#allocation5 + $0x60] sm:$0xff]
    %v69 = vld [vmem:[#allocation5 + $0x68] sm:$0xff]
    %v70 = vld [vmem:[#allocation5 + $0x70] sm:$0xff]
    %v71 = vld [vmem:[#allocation5 + $0x78] sm:$0xff]
    %72 = vmatpush.msra.mxu0 %v71
    %73 = vmatpush.msra.mxu0 %v70
    %74 = vmatpush.msra.mxu0 %v69
    %75 = vmatpush.msra.mxu0 %v68
    %76 = vmatpush.msra.mxu0 %v67
    %77 = vmatpush.msra.mxu0 %v66
    %78 = vmatpush.msra.mxu0 %v65
    %79 = vmatpush.msra.mxu0 %v64
    %80 = vmatpush.msra.mxu0 %v63
    %81 = vmatpush.msra.mxu0 %v62
    %82 = vmatpush.msra.mxu0 %v61
    %83 = vmatpush.msra.mxu0 %v60
    %84 = vmatpush.msra.mxu0 %v59
    %85 = vmatpush.msra.mxu0 %v58
    %86 = vmatpush.msra.mxu0 %v57
    %87 = vmatpush.msra.mxu0 %v56
    %88 = vmatmul.f32.gmra.mxu0 %v55
    %v89 = vpop.f32.mrf.mxu0
    %v90 = vadd.f32 0.0, %v89
    %91 = vdwg.mxu0
    %v92 = vadd.f32 %v54, %v90
    %93 = vst [vmem:[#allocation7] sm:$0xff] %v92
    // Predicated region
    $region26: #{tpu_custom_call.1} parent=1 // pred_check
      _
    $region27: #{tpu_custom_call.1} parent=1 // pred_check_branch
      %95 = sbr.rel (0) target = $region29
    $region28: #{tpu_custom_call.1} parent=1 // pred_region
      %97 = vsyncadd [#allocation4], 0
      %s99 = sshll.u32 [#allocation7], 4
      %s100 = int_to_ptr.vmem [resolvable:$true] %s99
      %s101 = sshll.u32 %s3, 4
      %s102 = int_to_ptr.hbm [resolvable:$true] %s101
      %104 = dma.vmem_to_hbm [thread:$0]  %s100, 128, %s102, [#allocation4]
    $region29: #{tpu_custom_call.1} parent=1 // pred_fallthru
      _
    // Predicated region
    $region30: #{tpu_custom_call.1} parent=1 // pred_check
      _
    $region31: #{tpu_custom_call.1} parent=1 // pred_check_branch
      %106 = sbr.rel (0) target = $region33
    $region32: #{tpu_custom_call.1} parent=1 // pred_region
      %108 = dma.done [#allocation4], 128
    $region33: #{tpu_custom_call.1} parent=1 // pred_fallthru
      _
    %109 = vsyncpa [#allocation3], 1
    %110 = vsyncpa [#allocation6], 1
    %111 = vsyncpa [#allocation4], 1

</llo_original>
